<compile_context>
chip_gen: v5e
topology: v5e:2x2
jax: 0.10.0
libtpu: 0.0.40
codegen_flags: <defaults>
</compile_context>

<pallas_src>
import functools

import jax
import jax.numpy as jnp
from jax.experimental import pallas as pl
from jax.experimental.pallas import tpu as pltpu

_FEAT_PAD = 16   # extra feature rows; row E is the all-ones row carrying the bias


def _round_up(n, m):
    return ((n + m - 1) // m) * m


# ----------------------------------------------------------------------------
# entmax-1.5 across a static list of (H, R) columns — full-lane-width VPU/EUP.
# ----------------------------------------------------------------------------
def _entmax15_cols(cols):
    """Exact entmax-1.5 over the list index.

    cols[j] has shape (H, R): row = query-head, lane = (c, t) row.  Every op is
    elementwise on lane-dense vregs; the sort is an odd-even transposition
    network (compare/exchange), sqrt goes to the EUP; no cross-lane reductions.
    """
    n = len(cols)
    s = list(cols)
    for rnd in range(n):                       # descending sort
        for i in range(rnd % 2, n - 1, 2):
            hi = jnp.maximum(s[i], s[i + 1])
            lo = jnp.minimum(s[i], s[i + 1])
            s[i], s[i + 1] = hi, lo

    max_val = s[0]
    z_sorted = [(sk - max_val) * 0.5 for sk in s]      # alpha = 1.5 transform

    cs = jnp.zeros_like(max_val)
    cs2 = jnp.zeros_like(max_val)
    support = jnp.zeros_like(max_val)
    taus = []
    for k in range(n):
        zk = z_sorted[k]
        cs = cs + zk
        cs2 = cs2 + zk * zk
        inv_rho = 1.0 / float(k + 1)
        mean = cs * inv_rho
        ss = cs2 - cs * mean                   # = rho * (mean_sq - mean^2)
        delta = (1.0 - ss) * inv_rho
        tau = mean - jnp.sqrt(jnp.maximum(delta, 0.0))
        taus.append(tau)
        support = support + (tau <= zk).astype(jnp.float32)

    tau_star = jnp.zeros_like(max_val)
    for k in range(n):
        tau_star = tau_star + jnp.where(support == float(k + 1), taus[k], 0.0)

    outs = []
    for j in range(n):
        y = jnp.maximum((cols[j] - max_val) * 0.5 - tau_star, 0.0)
        outs.append(y * y)
    return outs


# ----------------------------------------------------------------------------
# Pallas kernel: one lane tile of R rows per grid step, rows on the lane axis.
# ----------------------------------------------------------------------------
def _mha_kernel(x_ref, w_ref, o_ref, *, H, D, E):
    x = x_ref[...]                    # (E+PAD, R)  bf16; row E is all-ones (bias)
    w = w_ref[...]                    # (3E, E+PAD) bf16; block-diag QKV + bias col

    # Fused Q/K/V projection (+bias, +score scale folded into the Q block):
    # one lane-dense MXU matmul with f32 accumulation.
    qkv = jnp.dot(w, x, preferred_element_type=jnp.float32)      # (3E, R) f32

    # Aligned static per-head slices (no reshapes -> no relayout copies).
    q_heads = [qkv[a * D:(a + 1) * D, :] for a in range(H)]              # scaled
    k_heads = [qkv[E + b * D:E + (b + 1) * D, :] for b in range(H)]
    v_heads = [qkv[2 * E + b * D:2 * E + (b + 1) * D, :] for b in range(H)]

    # Head-vs-head scores, rows-on-lanes: dense (D, R) VPU multiplies + a
    # sublane sum (XLU slot) — replaces `rows` near-empty batched MXU matmuls.
    score_cols = []
    for b in range(H):
        rows_ab = [jnp.sum(q_heads[a] * k_heads[b], axis=0, keepdims=True)
                   for a in range(H)]
        score_cols.append(jnp.concatenate(rows_ab, axis=0))              # (H, R)

    attn_cols = _entmax15_cols(score_cols)                               # (H, R)

    # attn @ V as lane-wide FMAs: out[head a] = sum_b attn[a, b] * v[head b].
    out_blocks = []
    for a in range(H):
        acc = attn_cols[0][a:a + 1, :] * v_heads[0]                      # (D, R)
        for b in range(1, H):
            acc = acc + attn_cols[b][a:a + 1, :] * v_heads[b]
        out_blocks.append(acc)
    o_ref[...] = jnp.concatenate(out_blocks, axis=0)                     # (E, R)


# ----------------------------------------------------------------------------
# Wrapper: parameter packing + pallas_call.
# ----------------------------------------------------------------------------
def _pack_qkv_slab(params, H, D, E, dtype):
    """Fused (3E, E+PAD) projection slab for the rows-on-lanes layout.

    Rows: block-diagonal kron(I_H, W) per Q/K/V (same per-head Linear applied
    to every head).  Column E holds the bias (paired with the all-ones feature
    row appended to x); remaining pad columns are zero.  The 1/sqrt(E) score
    scale is folded into the Q block (weights are packed once per call, free).
    """
    scale = 1.0 / (E ** 0.5)
    eye = jnp.eye(H, dtype=jnp.float32)

    def blk(wmat, bvec, s):
        wblk = jnp.kron(eye, wmat.astype(jnp.float32) * s)       # (E, E)
        bblk = jnp.tile(bvec.astype(jnp.float32) * s, H)         # (E,)
        return wblk, bblk

    wq, bq = blk(params["wq"], params["bq"], scale)
    wk, bk = blk(params["wk"], params["bk"], 1.0)
    wv, bv = blk(params["wv"], params["bv"], 1.0)
    w3 = jnp.concatenate([wq, wk, wv], axis=0)                   # (3E, E)
    b3 = jnp.concatenate([bq, bk, bv])                           # (3E,)
    extra = jnp.zeros((3 * E, _FEAT_PAD), jnp.float32).at[:, 0].set(b3)
    return jnp.concatenate([w3, extra], axis=1).astype(dtype)    # (3E, E+PAD)


def multi_head_attention(x, params, heads, block_rows=512,
                         matmul_dtype=jnp.bfloat16):
    """Pallas forward of MultiHeadAttention. x: (C, T, E) float32."""
    C, T, E = x.shape
    H = heads
    D = E // H
    rows = C * T

    # Row tile lives on the lane axis -> multiple of 128.  Default 512 lanes
    # (multiple of 256 for the v6e/v7x MXU minor dim) gives many pipelined
    # "parallel" grid steps on large inputs while staying far under the v7x
    # 64 MiB per-TC VMEM budget; tiny inputs collapse to one 128-lane tile.
    R = min(block_rows, _round_up(rows, 128))
    R = max(128, (R // 128) * 128)
    rows_pad = _round_up(rows, R)
    n_tiles = rows_pad // R
    Kp = E + _FEAT_PAD

    # Lane-dense input slab (E+PAD, rows_pad): transposed features on sublanes,
    # rows on lanes, plus the all-ones row at index E that carries the bias
    # through the fused projection matmul.  Wrapper-side transpose/pad is
    # layout plumbing; matmul operands are bf16, entmax math stays f32.
    x_t = x.reshape(rows, E).T.astype(jnp.float32)               # (E, rows)
    ones = jnp.ones((1, rows), jnp.float32)
    zpad = jnp.zeros((_FEAT_PAD - 1, rows), jnp.float32)
    x_aug = jnp.concatenate([x_t, ones, zpad], axis=0)           # (Kp, rows)
    x_aug = jnp.pad(x_aug, ((0, 0), (0, rows_pad - rows))).astype(matmul_dtype)

    w_slab = _pack_qkv_slab(params, H, D, E, matmul_dtype)       # (3E, Kp)

    kernel = functools.partial(_mha_kernel, H=H, D=D, E=E)
    out_t = pl.pallas_call(
        kernel,
        out_shape=jax.ShapeDtypeStruct((E, rows_pad), jnp.float32),
        grid=(n_tiles,),
        in_specs=[
            pl.BlockSpec((Kp, R), lambda i: (0, i)),             # x, lane-dense
            pl.BlockSpec((3 * E, Kp), lambda i: (0, 0),          # grid-constant
                         pipeline_mode=pl.Buffered(1)),          # single buffer
        ],
        out_specs=pl.BlockSpec((E, R), lambda i: (0, i)),        # lane-dense out
        compiler_params=pltpu.CompilerParams(
            dimension_semantics=("parallel",),
            vmem_limit_bytes=32 * 1024 * 1024),
    )(x_aug, w_slab)

    return out_t[:, :rows].T.reshape(C, T, E)


# ----------------------------------------------------------------------------
# Pure-JAX reference (mirrors the PyTorch module + entmax package exactly).
# ----------------------------------------------------------------------------
def _entmax15_ref(z):
    K = z.shape[-1]
    z = z - jnp.max(z, axis=-1, keepdims=True)
    z = z / 2.0
    zsrt = -jnp.sort(-z, axis=-1)  # descending
    rho = jnp.arange(1, K + 1, dtype=z.dtype).reshape((1,) * (z.ndim - 1) + (K,))
    mean = jnp.cumsum(zsrt, axis=-1) / rho
    mean_sq = jnp.cumsum(zsrt ** 2, axis=-1) / rho
    ss = rho * (mean_sq - mean ** 2)
    delta = (1.0 - ss) / rho
    tau = mean - jnp.sqrt(jnp.clip(delta, 0.0, None))
    support = jnp.sum((tau <= zsrt).astype(jnp.int32), axis=-1, keepdims=True)
    tau_star = jnp.take_along_axis(tau, support - 1, axis=-1)
    return jnp.clip(z - tau_star, 0.0, None) ** 2


def mha_reference(x, params, heads):
    C, T, E = x.shape
    D = E // heads
    hp = jax.lax.Precision.HIGHEST
    xh = x.reshape(C, T, heads, D)
    q = jnp.einsum("cthd,od->ctho", xh, params["wq"], precision=hp) + params["bq"]
    k = jnp.einsum("cthd,od->ctho", xh, params["wk"], precision=hp) + params["bk"]
    v = jnp.einsum("cthd,od->ctho", xh, params["wv"], precision=hp) + params["bv"]
    scores = jnp.einsum("ctid,ctjd->ctij", q, k, precision=hp) / (E ** 0.5)
    attn = _entmax15_ref(scores)
    out = jnp.einsum("ctij,ctjd->ctid", attn, v, precision=hp)
    return out.reshape(C, T, E)


if __name__ == "__main__":
    embed_size, heads = 32, 4
    C, T = 2, 8
    D = embed_size // heads

    key = jax.random.PRNGKey(0)
    kx, kwq, kbq, kwk, kbk, kwv, kbv = jax.random.split(key, 7)
    bound = 1.0 / (D ** 0.5)  # matches nn.Linear default init range
    params = {
        "wq": jax.random.uniform(kwq, (D, D), jnp.float32, -bound, bound),
        "bq": jax.random.uniform(kbq, (D,), jnp.float32, -bound, bound),
        "wk": jax.random.uniform(kwk, (D, D), jnp.float32, -bound, bound),
        "bk": jax.random.uniform(kbk, (D,), jnp.float32, -bound, bound),
        "wv": jax.random.uniform(kwv, (D, D), jnp.float32, -bound, bound),
        "bv": jax.random.uniform(kbv, (D,), jnp.float32, -bound, bound),
    }
    x = jax.random.normal(kx, (C, T, embed_size), jnp.float32)

    out = multi_head_attention(x, params, heads)
    out = jax.block_until_ready(out)

    ref = mha_reference(x, params, heads)
    assert out.shape == (C, T, embed_size)
    # Kernel projection uses bf16 MXU operands (f32 accumulation) while the
    # reference is full f32/HIGHEST, so the tolerance is loosened accordingly;
    # any real bug (wrong head mapping, wrong tau) would produce O(1) errors.
    if not jnp.allclose(out, ref, atol=5e-2, rtol=5e-2):
        raise AssertionError(
            f"mismatch, max abs err = {float(jnp.max(jnp.abs(out - ref)))}")
    print("KERNEL_OK")
</pallas_src>

<mosaic_0001>
module attributes {stable_mosaic.version = 11 : i64} {
  func.func @_mha_kernel(%arg0: i32, %arg1: memref<48x128xbf16, #tpu.memory_space<vmem>>, %arg2: memref<96x48xbf16, #tpu.memory_space<vmem>>, %arg3: memref<32x128xf32, #tpu.memory_space<vmem>>) attributes {dimension_semantics = [#tpu.dimension_semantics<parallel>], iteration_bounds = array<i64: 1>, scalar_prefetch = 0 : i64, scratch_operands = 0 : i64, tpu.core_type = #tpu.core_type<tc>, window_params = [{transform_indices = @transform_0, window_bounds = array<i64: 48, 128>}, {pipeline_mode = #tpu.pipeline_mode<synchronous>, transform_indices = @transform_1, window_bounds = array<i64: 96, 48>}, {transform_indices = @transform_2, window_bounds = array<i64: 32, 128>}]} {
    %c0 = arith.constant 0 : index
    %c0_0 = arith.constant 0 : index
    %0 = vector.load %arg1[%c0, %c0_0] : memref<48x128xbf16, #tpu.memory_space<vmem>>, vector<48x128xbf16>
    %c0_1 = arith.constant 0 : index
    %c0_2 = arith.constant 0 : index
    %1 = vector.load %arg2[%c0_1, %c0_2] : memref<96x48xbf16, #tpu.memory_space<vmem>>, vector<96x48xbf16>
    %cst = arith.constant dense<0.000000e+00> : vector<96x128xf32>
    %2 = tpu.matmul %1, %0, %cst {dimension_numbers = #tpu.dot_dimension_numbers<[1], [0], [0], [1], [0, 0, 1, 1], [], []>} : vector<96x48xbf16>, vector<48x128xbf16>, vector<96x128xf32> -> vector<96x128xf32>
    %3 = vector.extract_strided_slice %2 {offsets = [0, 0], sizes = [8, 128], strides = [1, 1]} : vector<96x128xf32> to vector<8x128xf32>
    %4 = vector.extract_strided_slice %2 {offsets = [8, 0], sizes = [8, 128], strides = [1, 1]} : vector<96x128xf32> to vector<8x128xf32>
    %5 = vector.extract_strided_slice %2 {offsets = [16, 0], sizes = [8, 128], strides = [1, 1]} : vector<96x128xf32> to vector<8x128xf32>
    %6 = vector.extract_strided_slice %2 {offsets = [24, 0], sizes = [8, 128], strides = [1, 1]} : vector<96x128xf32> to vector<8x128xf32>
    %7 = vector.extract_strided_slice %2 {offsets = [32, 0], sizes = [8, 128], strides = [1, 1]} : vector<96x128xf32> to vector<8x128xf32>
    %8 = vector.extract_strided_slice %2 {offsets = [40, 0], sizes = [8, 128], strides = [1, 1]} : vector<96x128xf32> to vector<8x128xf32>
    %9 = vector.extract_strided_slice %2 {offsets = [48, 0], sizes = [8, 128], strides = [1, 1]} : vector<96x128xf32> to vector<8x128xf32>
    %10 = vector.extract_strided_slice %2 {offsets = [56, 0], sizes = [8, 128], strides = [1, 1]} : vector<96x128xf32> to vector<8x128xf32>
    %11 = vector.extract_strided_slice %2 {offsets = [64, 0], sizes = [8, 128], strides = [1, 1]} : vector<96x128xf32> to vector<8x128xf32>
    %12 = vector.extract_strided_slice %2 {offsets = [72, 0], sizes = [8, 128], strides = [1, 1]} : vector<96x128xf32> to vector<8x128xf32>
    %13 = vector.extract_strided_slice %2 {offsets = [80, 0], sizes = [8, 128], strides = [1, 1]} : vector<96x128xf32> to vector<8x128xf32>
    %14 = vector.extract_strided_slice %2 {offsets = [88, 0], sizes = [8, 128], strides = [1, 1]} : vector<96x128xf32> to vector<8x128xf32>
    %15 = arith.mulf %3, %7 : vector<8x128xf32>
    %cst_3 = arith.constant dense<0.000000e+00> : vector<128xf32>
    %16 = vector.multi_reduction <add>, %15, %cst_3 [0] : vector<8x128xf32> to vector<128xf32>
    %17 = vector.shape_cast %16 : vector<128xf32> to vector<1x128xf32>
    %18 = arith.mulf %4, %7 : vector<8x128xf32>
    %cst_4 = arith.constant dense<0.000000e+00> : vector<128xf32>
    %19 = vector.multi_reduction <add>, %18, %cst_4 [0] : vector<8x128xf32> to vector<128xf32>
    %20 = vector.shape_cast %19 : vector<128xf32> to vector<1x128xf32>
    %21 = arith.mulf %5, %7 : vector<8x128xf32>
    %cst_5 = arith.constant dense<0.000000e+00> : vector<128xf32>
    %22 = vector.multi_reduction <add>, %21, %cst_5 [0] : vector<8x128xf32> to vector<128xf32>
    %23 = vector.shape_cast %22 : vector<128xf32> to vector<1x128xf32>
    %24 = arith.mulf %6, %7 : vector<8x128xf32>
    %cst_6 = arith.constant dense<0.000000e+00> : vector<128xf32>
    %25 = vector.multi_reduction <add>, %24, %cst_6 [0] : vector<8x128xf32> to vector<128xf32>
    %26 = vector.shape_cast %25 : vector<128xf32> to vector<1x128xf32>
    %27 = tpu.concatenate %17, %20, %23, %26 in 0 : vector<1x128xf32>, vector<1x128xf32>, vector<1x128xf32>, vector<1x128xf32> -> vector<4x128xf32>
    %28 = arith.mulf %3, %8 : vector<8x128xf32>
    %cst_7 = arith.constant dense<0.000000e+00> : vector<128xf32>
    %29 = vector.multi_reduction <add>, %28, %cst_7 [0] : vector<8x128xf32> to vector<128xf32>
    %30 = vector.shape_cast %29 : vector<128xf32> to vector<1x128xf32>
    %31 = arith.mulf %4, %8 : vector<8x128xf32>
    %cst_8 = arith.constant dense<0.000000e+00> : vector<128xf32>
    %32 = vector.multi_reduction <add>, %31, %cst_8 [0] : vector<8x128xf32> to vector<128xf32>
    %33 = vector.shape_cast %32 : vector<128xf32> to vector<1x128xf32>
    %34 = arith.mulf %5, %8 : vector<8x128xf32>
    %cst_9 = arith.constant dense<0.000000e+00> : vector<128xf32>
    %35 = vector.multi_reduction <add>, %34, %cst_9 [0] : vector<8x128xf32> to vector<128xf32>
    %36 = vector.shape_cast %35 : vector<128xf32> to vector<1x128xf32>
    %37 = arith.mulf %6, %8 : vector<8x128xf32>
    %cst_10 = arith.constant dense<0.000000e+00> : vector<128xf32>
    %38 = vector.multi_reduction <add>, %37, %cst_10 [0] : vector<8x128xf32> to vector<128xf32>
    %39 = vector.shape_cast %38 : vector<128xf32> to vector<1x128xf32>
    %40 = tpu.concatenate %30, %33, %36, %39 in 0 : vector<1x128xf32>, vector<1x128xf32>, vector<1x128xf32>, vector<1x128xf32> -> vector<4x128xf32>
    %41 = arith.mulf %3, %9 : vector<8x128xf32>
    %cst_11 = arith.constant dense<0.000000e+00> : vector<128xf32>
    %42 = vector.multi_reduction <add>, %41, %cst_11 [0] : vector<8x128xf32> to vector<128xf32>
    %43 = vector.shape_cast %42 : vector<128xf32> to vector<1x128xf32>
    %44 = arith.mulf %4, %9 : vector<8x128xf32>
    %cst_12 = arith.constant dense<0.000000e+00> : vector<128xf32>
    %45 = vector.multi_reduction <add>, %44, %cst_12 [0] : vector<8x128xf32> to vector<128xf32>
    %46 = vector.shape_cast %45 : vector<128xf32> to vector<1x128xf32>
    %47 = arith.mulf %5, %9 : vector<8x128xf32>
    %cst_13 = arith.constant dense<0.000000e+00> : vector<128xf32>
    %48 = vector.multi_reduction <add>, %47, %cst_13 [0] : vector<8x128xf32> to vector<128xf32>
    %49 = vector.shape_cast %48 : vector<128xf32> to vector<1x128xf32>
    %50 = arith.mulf %6, %9 : vector<8x128xf32>
    %cst_14 = arith.constant dense<0.000000e+00> : vector<128xf32>
    %51 = vector.multi_reduction <add>, %50, %cst_14 [0] : vector<8x128xf32> to vector<128xf32>
    %52 = vector.shape_cast %51 : vector<128xf32> to vector<1x128xf32>
    %53 = tpu.concatenate %43, %46, %49, %52 in 0 : vector<1x128xf32>, vector<1x128xf32>, vector<1x128xf32>, vector<1x128xf32> -> vector<4x128xf32>
    %54 = arith.mulf %3, %10 : vector<8x128xf32>
    %cst_15 = arith.constant dense<0.000000e+00> : vector<128xf32>
    %55 = vector.multi_reduction <add>, %54, %cst_15 [0] : vector<8x128xf32> to vector<128xf32>
    %56 = vector.shape_cast %55 : vector<128xf32> to vector<1x128xf32>
    %57 = arith.mulf %4, %10 : vector<8x128xf32>
    %cst_16 = arith.constant dense<0.000000e+00> : vector<128xf32>
    %58 = vector.multi_reduction <add>, %57, %cst_16 [0] : vector<8x128xf32> to vector<128xf32>
    %59 = vector.shape_cast %58 : vector<128xf32> to vector<1x128xf32>
    %60 = arith.mulf %5, %10 : vector<8x128xf32>
    %cst_17 = arith.constant dense<0.000000e+00> : vector<128xf32>
    %61 = vector.multi_reduction <add>, %60, %cst_17 [0] : vector<8x128xf32> to vector<128xf32>
    %62 = vector.shape_cast %61 : vector<128xf32> to vector<1x128xf32>
    %63 = arith.mulf %6, %10 : vector<8x128xf32>
    %cst_18 = arith.constant dense<0.000000e+00> : vector<128xf32>
    %64 = vector.multi_reduction <add>, %63, %cst_18 [0] : vector<8x128xf32> to vector<128xf32>
    %65 = vector.shape_cast %64 : vector<128xf32> to vector<1x128xf32>
    %66 = tpu.concatenate %56, %59, %62, %65 in 0 : vector<1x128xf32>, vector<1x128xf32>, vector<1x128xf32>, vector<1x128xf32> -> vector<4x128xf32>
    %67 = arith.maximumf %27, %40 : vector<4x128xf32>
    %68 = arith.minimumf %27, %40 : vector<4x128xf32>
    %69 = arith.maximumf %53, %66 : vector<4x128xf32>
    %70 = arith.minimumf %53, %66 : vector<4x128xf32>
    %71 = arith.maximumf %68, %69 : vector<4x128xf32>
    %72 = arith.minimumf %68, %69 : vector<4x128xf32>
    %73 = arith.maximumf %67, %71 : vector<4x128xf32>
    %74 = arith.minimumf %67, %71 : vector<4x128xf32>
    %75 = arith.maximumf %72, %70 : vector<4x128xf32>
    %76 = arith.minimumf %72, %70 : vector<4x128xf32>
    %77 = arith.maximumf %74, %75 : vector<4x128xf32>
    %78 = arith.minimumf %74, %75 : vector<4x128xf32>
    %79 = arith.subf %73, %73 : vector<4x128xf32>
    %cst_19 = arith.constant 5.000000e-01 : f32
    %80 = vector.broadcast %cst_19 : f32 to vector<4x128xf32>
    %81 = arith.mulf %79, %80 : vector<4x128xf32>
    %82 = arith.subf %77, %73 : vector<4x128xf32>
    %cst_20 = arith.constant 5.000000e-01 : f32
    %83 = vector.broadcast %cst_20 : f32 to vector<4x128xf32>
    %84 = arith.mulf %82, %83 : vector<4x128xf32>
    %85 = arith.subf %78, %73 : vector<4x128xf32>
    %cst_21 = arith.constant 5.000000e-01 : f32
    %86 = vector.broadcast %cst_21 : f32 to vector<4x128xf32>
    %87 = arith.mulf %85, %86 : vector<4x128xf32>
    %88 = arith.subf %76, %73 : vector<4x128xf32>
    %cst_22 = arith.constant 5.000000e-01 : f32
    %89 = vector.broadcast %cst_22 : f32 to vector<4x128xf32>
    %90 = arith.mulf %88, %89 : vector<4x128xf32>
    %cst_23 = arith.constant 0.000000e+00 : f32
    %91 = vector.broadcast %cst_23 : f32 to vector<4x128xf32>
    %cst_24 = arith.constant 0.000000e+00 : f32
    %92 = vector.broadcast %cst_24 : f32 to vector<4x128xf32>
    %cst_25 = arith.constant 0.000000e+00 : f32
    %93 = vector.broadcast %cst_25 : f32 to vector<4x128xf32>
    %94 = arith.addf %91, %81 : vector<4x128xf32>
    %95 = arith.mulf %81, %81 : vector<4x128xf32>
    %96 = arith.addf %92, %95 : vector<4x128xf32>
    %cst_26 = arith.constant 1.000000e+00 : f32
    %97 = vector.broadcast %cst_26 : f32 to vector<4x128xf32>
    %98 = arith.mulf %94, %97 : vector<4x128xf32>
    %99 = arith.mulf %94, %98 : vector<4x128xf32>
    %100 = arith.subf %96, %99 : vector<4x128xf32>
    %cst_27 = arith.constant 1.000000e+00 : f32
    %101 = vector.broadcast %cst_27 : f32 to vector<4x128xf32>
    %102 = arith.subf %101, %100 : vector<4x128xf32>
    %cst_28 = arith.constant 1.000000e+00 : f32
    %103 = vector.broadcast %cst_28 : f32 to vector<4x128xf32>
    %104 = arith.mulf %102, %103 : vector<4x128xf32>
    %cst_29 = arith.constant 0.000000e+00 : f32
    %105 = vector.broadcast %cst_29 : f32 to vector<4x128xf32>
    %106 = arith.maximumf %104, %105 : vector<4x128xf32>
    %107 = math.sqrt %106 : vector<4x128xf32>
    %108 = arith.subf %98, %107 : vector<4x128xf32>
    %109 = arith.cmpf ole, %108, %81 : vector<4x128xf32>
    %110 = arith.extui %109 : vector<4x128xi1> to vector<4x128xi32>
    %111 = arith.sitofp %110 : vector<4x128xi32> to vector<4x128xf32>
    %112 = arith.addf %93, %111 : vector<4x128xf32>
    %113 = arith.addf %94, %84 : vector<4x128xf32>
    %114 = arith.mulf %84, %84 : vector<4x128xf32>
    %115 = arith.addf %96, %114 : vector<4x128xf32>
    %cst_30 = arith.constant 5.000000e-01 : f32
    %116 = vector.broadcast %cst_30 : f32 to vector<4x128xf32>
    %117 = arith.mulf %113, %116 : vector<4x128xf32>
    %118 = arith.mulf %113, %117 : vector<4x128xf32>
    %119 = arith.subf %115, %118 : vector<4x128xf32>
    %cst_31 = arith.constant 1.000000e+00 : f32
    %120 = vector.broadcast %cst_31 : f32 to vector<4x128xf32>
    %121 = arith.subf %120, %119 : vector<4x128xf32>
    %cst_32 = arith.constant 5.000000e-01 : f32
    %122 = vector.broadcast %cst_32 : f32 to vector<4x128xf32>
    %123 = arith.mulf %121, %122 : vector<4x128xf32>
    %cst_33 = arith.constant 0.000000e+00 : f32
    %124 = vector.broadcast %cst_33 : f32 to vector<4x128xf32>
    %125 = arith.maximumf %123, %124 : vector<4x128xf32>
    %126 = math.sqrt %125 : vector<4x128xf32>
    %127 = arith.subf %117, %126 : vector<4x128xf32>
    %128 = arith.cmpf ole, %127, %84 : vector<4x128xf32>
    %129 = arith.extui %128 : vector<4x128xi1> to vector<4x128xi32>
    %130 = arith.sitofp %129 : vector<4x128xi32> to vector<4x128xf32>
    %131 = arith.addf %112, %130 : vector<4x128xf32>
    %132 = arith.addf %113, %87 : vector<4x128xf32>
    %133 = arith.mulf %87, %87 : vector<4x128xf32>
    %134 = arith.addf %115, %133 : vector<4x128xf32>
    %cst_34 = arith.constant 0.333333343 : f32
    %135 = vector.broadcast %cst_34 : f32 to vector<4x128xf32>
    %136 = arith.mulf %132, %135 : vector<4x128xf32>
    %137 = arith.mulf %132, %136 : vector<4x128xf32>
    %138 = arith.subf %134, %137 : vector<4x128xf32>
    %cst_35 = arith.constant 1.000000e+00 : f32
    %139 = vector.broadcast %cst_35 : f32 to vector<4x128xf32>
    %140 = arith.subf %139, %138 : vector<4x128xf32>
    %cst_36 = arith.constant 0.333333343 : f32
    %141 = vector.broadcast %cst_36 : f32 to vector<4x128xf32>
    %142 = arith.mulf %140, %141 : vector<4x128xf32>
    %cst_37 = arith.constant 0.000000e+00 : f32
    %143 = vector.broadcast %cst_37 : f32 to vector<4x128xf32>
    %144 = arith.maximumf %142, %143 : vector<4x128xf32>
    %145 = math.sqrt %144 : vector<4x128xf32>
    %146 = arith.subf %136, %145 : vector<4x128xf32>
    %147 = arith.cmpf ole, %146, %87 : vector<4x128xf32>
    %148 = arith.extui %147 : vector<4x128xi1> to vector<4x128xi32>
    %149 = arith.sitofp %148 : vector<4x128xi32> to vector<4x128xf32>
    %150 = arith.addf %131, %149 : vector<4x128xf32>
    %151 = arith.addf %132, %90 : vector<4x128xf32>
    %152 = arith.mulf %90, %90 : vector<4x128xf32>
    %153 = arith.addf %134, %152 : vector<4x128xf32>
    %cst_38 = arith.constant 2.500000e-01 : f32
    %154 = vector.broadcast %cst_38 : f32 to vector<4x128xf32>
    %155 = arith.mulf %151, %154 : vector<4x128xf32>
    %156 = arith.mulf %151, %155 : vector<4x128xf32>
    %157 = arith.subf %153, %156 : vector<4x128xf32>
    %cst_39 = arith.constant 1.000000e+00 : f32
    %158 = vector.broadcast %cst_39 : f32 to vector<4x128xf32>
    %159 = arith.subf %158, %157 : vector<4x128xf32>
    %cst_40 = arith.constant 2.500000e-01 : f32
    %160 = vector.broadcast %cst_40 : f32 to vector<4x128xf32>
    %161 = arith.mulf %159, %160 : vector<4x128xf32>
    %cst_41 = arith.constant 0.000000e+00 : f32
    %162 = vector.broadcast %cst_41 : f32 to vector<4x128xf32>
    %163 = arith.maximumf %161, %162 : vector<4x128xf32>
    %164 = math.sqrt %163 : vector<4x128xf32>
    %165 = arith.subf %155, %164 : vector<4x128xf32>
    %166 = arith.cmpf ole, %165, %90 : vector<4x128xf32>
    %167 = arith.extui %166 : vector<4x128xi1> to vector<4x128xi32>
    %168 = arith.sitofp %167 : vector<4x128xi32> to vector<4x128xf32>
    %169 = arith.addf %150, %168 : vector<4x128xf32>
    %cst_42 = arith.constant 0.000000e+00 : f32
    %170 = vector.broadcast %cst_42 : f32 to vector<4x128xf32>
    %cst_43 = arith.constant 1.000000e+00 : f32
    %171 = vector.broadcast %cst_43 : f32 to vector<4x128xf32>
    %172 = arith.cmpf oeq, %169, %171 : vector<4x128xf32>
    %cst_44 = arith.constant 0.000000e+00 : f32
    %173 = vector.broadcast %cst_44 : f32 to vector<4x128xf32>
    %174 = arith.select %172, %108, %173 : vector<4x128xi1>, vector<4x128xf32>
    %175 = arith.addf %170, %174 : vector<4x128xf32>
    %cst_45 = arith.constant 2.000000e+00 : f32
    %176 = vector.broadcast %cst_45 : f32 to vector<4x128xf32>
    %177 = arith.cmpf oeq, %169, %176 : vector<4x128xf32>
    %cst_46 = arith.constant 0.000000e+00 : f32
    %178 = vector.broadcast %cst_46 : f32 to vector<4x128xf32>
    %179 = arith.select %177, %127, %178 : vector<4x128xi1>, vector<4x128xf32>
    %180 = arith.addf %175, %179 : vector<4x128xf32>
    %cst_47 = arith.constant 3.000000e+00 : f32
    %181 = vector.broadcast %cst_47 : f32 to vector<4x128xf32>
    %182 = arith.cmpf oeq, %169, %181 : vector<4x128xf32>
    %cst_48 = arith.constant 0.000000e+00 : f32
    %183 = vector.broadcast %cst_48 : f32 to vector<4x128xf32>
    %184 = arith.select %182, %146, %183 : vector<4x128xi1>, vector<4x128xf32>
    %185 = arith.addf %180, %184 : vector<4x128xf32>
    %cst_49 = arith.constant 4.000000e+00 : f32
    %186 = vector.broadcast %cst_49 : f32 to vector<4x128xf32>
    %187 = arith.cmpf oeq, %169, %186 : vector<4x128xf32>
    %cst_50 = arith.constant 0.000000e+00 : f32
    %188 = vector.broadcast %cst_50 : f32 to vector<4x128xf32>
    %189 = arith.select %187, %165, %188 : vector<4x128xi1>, vector<4x128xf32>
    %190 = arith.addf %185, %189 : vector<4x128xf32>
    %191 = arith.subf %27, %73 : vector<4x128xf32>
    %cst_51 = arith.constant 5.000000e-01 : f32
    %192 = vector.broadcast %cst_51 : f32 to vector<4x128xf32>
    %193 = arith.mulf %191, %192 : vector<4x128xf32>
    %194 = arith.subf %193, %190 : vector<4x128xf32>
    %cst_52 = arith.constant 0.000000e+00 : f32
    %195 = vector.broadcast %cst_52 : f32 to vector<4x128xf32>
    %196 = arith.maximumf %194, %195 : vector<4x128xf32>
    %197 = arith.mulf %196, %196 : vector<4x128xf32>
    %198 = arith.subf %40, %73 : vector<4x128xf32>
    %cst_53 = arith.constant 5.000000e-01 : f32
    %199 = vector.broadcast %cst_53 : f32 to vector<4x128xf32>
    %200 = arith.mulf %198, %199 : vector<4x128xf32>
    %201 = arith.subf %200, %190 : vector<4x128xf32>
    %cst_54 = arith.constant 0.000000e+00 : f32
    %202 = vector.broadcast %cst_54 : f32 to vector<4x128xf32>
    %203 = arith.maximumf %201, %202 : vector<4x128xf32>
    %204 = arith.mulf %203, %203 : vector<4x128xf32>
    %205 = arith.subf %53, %73 : vector<4x128xf32>
    %cst_55 = arith.constant 5.000000e-01 : f32
    %206 = vector.broadcast %cst_55 : f32 to vector<4x128xf32>
    %207 = arith.mulf %205, %206 : vector<4x128xf32>
    %208 = arith.subf %207, %190 : vector<4x128xf32>
    %cst_56 = arith.constant 0.000000e+00 : f32
    %209 = vector.broadcast %cst_56 : f32 to vector<4x128xf32>
    %210 = arith.maximumf %208, %209 : vector<4x128xf32>
    %211 = arith.mulf %210, %210 : vector<4x128xf32>
    %212 = arith.subf %66, %73 : vector<4x128xf32>
    %cst_57 = arith.constant 5.000000e-01 : f32
    %213 = vector.broadcast %cst_57 : f32 to vector<4x128xf32>
    %214 = arith.mulf %212, %213 : vector<4x128xf32>
    %215 = arith.subf %214, %190 : vector<4x128xf32>
    %cst_58 = arith.constant 0.000000e+00 : f32
    %216 = vector.broadcast %cst_58 : f32 to vector<4x128xf32>
    %217 = arith.maximumf %215, %216 : vector<4x128xf32>
    %218 = arith.mulf %217, %217 : vector<4x128xf32>
    %219 = vector.extract_strided_slice %197 {offsets = [0, 0], sizes = [1, 128], strides = [1, 1]} : vector<4x128xf32> to vector<1x128xf32>
    %220 = vector.broadcast %219 : vector<1x128xf32> to vector<8x128xf32>
    %221 = arith.mulf %220, %11 : vector<8x128xf32>
    %222 = vector.extract_strided_slice %204 {offsets = [0, 0], sizes = [1, 128], strides = [1, 1]} : vector<4x128xf32> to vector<1x128xf32>
    %223 = vector.broadcast %222 : vector<1x128xf32> to vector<8x128xf32>
    %224 = arith.mulf %223, %12 : vector<8x128xf32>
    %225 = arith.addf %221, %224 : vector<8x128xf32>
    %226 = vector.extract_strided_slice %211 {offsets = [0, 0], sizes = [1, 128], strides = [1, 1]} : vector<4x128xf32> to vector<1x128xf32>
    %227 = vector.broadcast %226 : vector<1x128xf32> to vector<8x128xf32>
    %228 = arith.mulf %227, %13 : vector<8x128xf32>
    %229 = arith.addf %225, %228 : vector<8x128xf32>
    %230 = vector.extract_strided_slice %218 {offsets = [0, 0], sizes = [1, 128], strides = [1, 1]} : vector<4x128xf32> to vector<1x128xf32>
    %231 = vector.broadcast %230 : vector<1x128xf32> to vector<8x128xf32>
    %232 = arith.mulf %231, %14 : vector<8x128xf32>
    %233 = arith.addf %229, %232 : vector<8x128xf32>
    %234 = vector.extract_strided_slice %197 {offsets = [1, 0], sizes = [1, 128], strides = [1, 1]} : vector<4x128xf32> to vector<1x128xf32>
    %235 = vector.broadcast %234 : vector<1x128xf32> to vector<8x128xf32>
    %236 = arith.mulf %235, %11 : vector<8x128xf32>
    %237 = vector.extract_strided_slice %204 {offsets = [1, 0], sizes = [1, 128], strides = [1, 1]} : vector<4x128xf32> to vector<1x128xf32>
    %238 = vector.broadcast %237 : vector<1x128xf32> to vector<8x128xf32>
    %239 = arith.mulf %238, %12 : vector<8x128xf32>
    %240 = arith.addf %236, %239 : vector<8x128xf32>
    %241 = vector.extract_strided_slice %211 {offsets = [1, 0], sizes = [1, 128], strides = [1, 1]} : vector<4x128xf32> to vector<1x128xf32>
    %242 = vector.broadcast %241 : vector<1x128xf32> to vector<8x128xf32>
    %243 = arith.mulf %242, %13 : vector<8x128xf32>
    %244 = arith.addf %240, %243 : vector<8x128xf32>
    %245 = vector.extract_strided_slice %218 {offsets = [1, 0], sizes = [1, 128], strides = [1, 1]} : vector<4x128xf32> to vector<1x128xf32>
    %246 = vector.broadcast %245 : vector<1x128xf32> to vector<8x128xf32>
    %247 = arith.mulf %246, %14 : vector<8x128xf32>
    %248 = arith.addf %244, %247 : vector<8x128xf32>
    %249 = vector.extract_strided_slice %197 {offsets = [2, 0], sizes = [1, 128], strides = [1, 1]} : vector<4x128xf32> to vector<1x128xf32>
    %250 = vector.broadcast %249 : vector<1x128xf32> to vector<8x128xf32>
    %251 = arith.mulf %250, %11 : vector<8x128xf32>
    %252 = vector.extract_strided_slice %204 {offsets = [2, 0], sizes = [1, 128], strides = [1, 1]} : vector<4x128xf32> to vector<1x128xf32>
    %253 = vector.broadcast %252 : vector<1x128xf32> to vector<8x128xf32>
    %254 = arith.mulf %253, %12 : vector<8x128xf32>
    %255 = arith.addf %251, %254 : vector<8x128xf32>
    %256 = vector.extract_strided_slice %211 {offsets = [2, 0], sizes = [1, 128], strides = [1, 1]} : vector<4x128xf32> to vector<1x128xf32>
    %257 = vector.broadcast %256 : vector<1x128xf32> to vector<8x128xf32>
    %258 = arith.mulf %257, %13 : vector<8x128xf32>
    %259 = arith.addf %255, %258 : vector<8x128xf32>
    %260 = vector.extract_strided_slice %218 {offsets = [2, 0], sizes = [1, 128], strides = [1, 1]} : vector<4x128xf32> to vector<1x128xf32>
    %261 = vector.broadcast %260 : vector<1x128xf32> to vector<8x128xf32>
    %262 = arith.mulf %261, %14 : vector<8x128xf32>
    %263 = arith.addf %259, %262 : vector<8x128xf32>
    %264 = vector.extract_strided_slice %197 {offsets = [3, 0], sizes = [1, 128], strides = [1, 1]} : vector<4x128xf32> to vector<1x128xf32>
    %265 = vector.broadcast %264 : vector<1x128xf32> to vector<8x128xf32>
    %266 = arith.mulf %265, %11 : vector<8x128xf32>
    %267 = vector.extract_strided_slice %204 {offsets = [3, 0], sizes = [1, 128], strides = [1, 1]} : vector<4x128xf32> to vector<1x128xf32>
    %268 = vector.broadcast %267 : vector<1x128xf32> to vector<8x128xf32>
    %269 = arith.mulf %268, %12 : vector<8x128xf32>
    %270 = arith.addf %266, %269 : vector<8x128xf32>
    %271 = vector.extract_strided_slice %211 {offsets = [3, 0], sizes = [1, 128], strides = [1, 1]} : vector<4x128xf32> to vector<1x128xf32>
    %272 = vector.broadcast %271 : vector<1x128xf32> to vector<8x128xf32>
    %273 = arith.mulf %272, %13 : vector<8x128xf32>
    %274 = arith.addf %270, %273 : vector<8x128xf32>
    %275 = vector.extract_strided_slice %218 {offsets = [3, 0], sizes = [1, 128], strides = [1, 1]} : vector<4x128xf32> to vector<1x128xf32>
    %276 = vector.broadcast %275 : vector<1x128xf32> to vector<8x128xf32>
    %277 = arith.mulf %276, %14 : vector<8x128xf32>
    %278 = arith.addf %274, %277 : vector<8x128xf32>
    %279 = tpu.concatenate %233, %248, %263, %278 in 0 : vector<8x128xf32>, vector<8x128xf32>, vector<8x128xf32>, vector<8x128xf32> -> vector<32x128xf32>
    %c0_59 = arith.constant 0 : index
    %c0_60 = arith.constant 0 : index
    %280 = vector.load %arg3[%c0_59, %c0_60] : memref<32x128xf32, #tpu.memory_space<vmem>>, vector<32x128xf32>
    tpu.vector_store %arg3[%c0_59, %c0_60], %279 {strides = array<i32>} : memref<32x128xf32, #tpu.memory_space<vmem>>, vector<32x128xf32>,
    return
  }
  func.func @transform_0(%arg0: i32) -> (i32, i32) {
    %c0_i32 = arith.constant 0 : i32
    %c0_i32_0 = arith.constant 0 : i32
    return %c0_i32, %arg0 : i32, i32
  }
  func.func @transform_1(%arg0: i32) -> (i32, i32) {
    %c0_i32 = arith.constant 0 : i32
    %c0_i32_0 = arith.constant 0 : i32
    %c0_i32_1 = arith.constant 0 : i32
    return %c0_i32, %c0_i32_0 : i32, i32
  }
  func.func @transform_2(%arg0: i32) -> (i32, i32) {
    %c0_i32 = arith.constant 0 : i32
    %c0_i32_0 = arith.constant 0 : i32
    return %c0_i32, %arg0 : i32, i32
  }
}

</mosaic_0001>

<llo_original>
// kernel: tpu_custom_call.1
$region0: #{tpu_custom_call.1}
  #allocation0 [shape = 'u32[]', space=smem, size = 0x4, offset = 0x4, fixed_abs, tag = 'smem constant byte address 0x4 - core index']
  #allocation1 [shape = 'u32[72,128]{1,0:T(1,128)}', space=vmem, size = 0x9000, scoped, tag = 'internal scratch']
  %s0 = inlined_call_operand.vmem [shape: bf16[48,128], index: 0, kind: input, shape index: {}]
  %s1 = inlined_call_operand.vmem [shape: bf16[96,48], index: 1, kind: input, shape index: {}]
  %s2 = inlined_call_operand.hbm [shape: f32[32,128], index: 2, kind: output, shape index: {}]
  %s3 = sld [smem:[#allocation0]]
  $region18: #{tpu_custom_call.1} parent=0
    _
  %s5 = ssub.s32 1, %s3
  %s6 = scalar_select 0, %s5, %s3
  $region1: #{tpu_custom_call.1} parent=0
    #allocation2 [shape = 'u8[16384]{0}', space=vmem, size = 0x4000, scoped, tag = 'output window, operand 0, single buffered']
    #allocation3 [shape = 's32[1]{0}', space=sflag, size = 0x4, scoped, tag = 'scoped memory for tpu_custom_call.1']
    %7 = vsyncpa [#allocation3], 0
    // Predicated region
    $region2: #{tpu_custom_call.1} parent=1 // pred_check
      _
    $region3: #{tpu_custom_call.1} parent=1 // pred_check_branch
      %9 = sbr.rel (0) target = $region5
    $region4: #{tpu_custom_call.1} parent=1 // pred_region
      _
    $region5: #{tpu_custom_call.1} parent=1 // pred_fallthru
      _
    // Predicated region
    $region6: #{tpu_custom_call.1} parent=1 // pred_check
      _
    $region7: #{tpu_custom_call.1} parent=1 // pred_check_branch
      %11 = sbr.rel (0) target = $region9
    $region8: #{tpu_custom_call.1} parent=1 // pred_region
      _
    $region9: #{tpu_custom_call.1} parent=1 // pred_fallthru
      _
    %v13 = vld [vmem:[%s0] sm:$0xf]
    %v14 = vld [vmem:[%s0 + $0x4] sm:$0xf]
    %v15 = vld [vmem:[%s0 + $0x8] sm:$0xf]
    %v16 = vld [vmem:[%s0 + $0xc] sm:$0xf]
    %v17 = vld [vmem:[%s0 + $0x10] sm:$0xf]
    %v18 = vld [vmem:[%s0 + $0x14] sm:$0xf]
    %v19 = vld [vmem:[%s1] sm:$0xf]
    %v20 = vld [vmem:[%s1 + $0x4] sm:$0xf]
    %v21 = vld [vmem:[%s1 + $0x8] sm:$0xf]
    %v22 = vld [vmem:[%s1 + $0xc] sm:$0xf]
    %v23 = vld [vmem:[%s1 + $0x10] sm:$0xf]
    %v24 = vld [vmem:[%s1 + $0x14] sm:$0xf]
    %v25 = vld [vmem:[%s1 + $0x18] sm:$0xf]
    %v26 = vld [vmem:[%s1 + $0x1c] sm:$0xf]
    %v27 = vld [vmem:[%s1 + $0x20] sm:$0xf]
    %v28 = vld [vmem:[%s1 + $0x24] sm:$0xf]
    %v29 = vld [vmem:[%s1 + $0x28] sm:$0xf]
    %v30 = vld [vmem:[%s1 + $0x2c] sm:$0xf]
    %v43 = vunpack.c.l.b16 %v19
    %v44 = vunpack.c.l.b16 %v20
    %v45 = vunpack.c.l.b16 %v21
    %v46 = vunpack.c.l.b16 %v22
    %v47 = vunpack.c.l.b16 %v23
    %v48 = vunpack.c.l.b16 %v24
    %v49 = vunpack.c.l.b16 %v25
    %v50 = vunpack.c.l.b16 %v26
    %v51 = vunpack.c.l.b16 %v27
    %v52 = vunpack.c.l.b16 %v28
    %v53 = vunpack.c.l.b16 %v29
    %v54 = vunpack.c.l.b16 %v30
    %v55 = vpack.c.b16 %v44, %v43
    %v56 = vpack.c.b16 %v46, %v45
    %v57 = vpack.c.b16 %v48, %v47
    %v58 = vpack.c.b16 %v50, %v49
    %v59 = vpack.c.b16 %v52, %v51
    %v60 = vpack.c.b16 %v54, %v53
    %v67 = vunpack.c.l.b16 %v13
    %v68 = vunpack.c.l.b16 %v14
    %v69 = vunpack.c.l.b16 %v15
    %v70 = vunpack.c.l.b16 %v16
    %v71 = vunpack.c.l.b16 %v17
    %v72 = vunpack.c.l.b16 %v18
    %v73 = vpack.c.b16 %v68, %v67
    %v74 = vpack.c.b16 %v70, %v69
    %v75 = vpack.c.b16 %v72, %v71
    %vm79 = vcmask 392192
    %v81 = vsel %vm79, %v55, 0
    %v84 = vsel %vm79, %v56, 0
    %v87 = vsel %vm79, %v57, 0
    %v90 = vsel %vm79, %v58, 0
    %v93 = vsel %vm79, %v59, 0
    %v96 = vsel %vm79, %v60, 0
    %98 = vmatpush.bf16.msra.mxu0 0
    %99 = vmatpush.bf16.msra.mxu0 0
    %100 = vmatpush.bf16.msra.mxu0 0
    %101 = vmatpush.bf16.msra.mxu0 0
    %102 = vmatpush.bf16.msra.mxu0 0
    %103 = vmatpush.bf16.msra.mxu0 %v75
    %104 = vmatpush.bf16.msra.mxu0 %v74
    %105 = vmatpush.bf16.msra.mxu0 %v73
    %106 = vmatmul.bf16.gmra.mxu0 %v81
    %v107 = vpop.f32.mrf.mxu0
    %v108 = vadd.f32 0.0, %v107
    %v109 = vpop.f32.mrf.mxu0
    %v110 = vadd.f32 0.0, %v109
    %111 = vmatmul.bf16.gmra.mxu0 %v84
    %v112 = vpop.f32.mrf.mxu0
    %v113 = vadd.f32 0.0, %v112
    %v114 = vpop.f32.mrf.mxu0
    %v115 = vadd.f32 0.0, %v114
    %116 = vmatmul.bf16.gmra.mxu0 %v87
    %v117 = vpop.f32.mrf.mxu0
    %v118 = vadd.f32 0.0, %v117
    %v119 = vpop.f32.mrf.mxu0
    %v120 = vadd.f32 0.0, %v119
    %121 = vmatmul.bf16.gmra.mxu0 %v90
    %v122 = vpop.f32.mrf.mxu0
    %v123 = vadd.f32 0.0, %v122
    %v124 = vpop.f32.mrf.mxu0
    %v125 = vadd.f32 0.0, %v124
    %126 = vmatmul.bf16.gmra.mxu0 %v93
    %v127 = vpop.f32.mrf.mxu0
    %v128 = vadd.f32 0.0, %v127
    %v129 = vpop.f32.mrf.mxu0
    %v130 = vadd.f32 0.0, %v129
    %131 = vmatmul.bf16.gmra.mxu0 %v96
    %v132 = vpop.f32.mrf.mxu0
    %v133 = vadd.f32 0.0, %v132
    %v134 = vpop.f32.mrf.mxu0
    %v135 = vadd.f32 0.0, %v134
    %136 = vdwg.mxu0
    %v137 = vmul.f32 %v108, %v118
    %v138 = vrot.slane %v137, 4
    %v139 = vadd.f32 %v137, %v138
    %v140 = vrot.slane %v139, 2
    %v141 = vadd.f32 %v139, %v140
    %v142 = vrot.slane %v141, 1
    %v143 = vadd.f32 %v141, %v142
    %v144 = vmul.f32 %v110, %v118
    %v145 = vrot.slane %v144, 4
    %v146 = vadd.f32 %v144, %v145
    %v147 = vrot.slane %v146, 2
    %v148 = vadd.f32 %v146, %v147
    %v149 = vrot.slane %v148, 1
    %v150 = vadd.f32 %v148, %v149
    %v151 = vmul.f32 %v113, %v118
    %v152 = vrot.slane %v151, 4
    %v153 = vadd.f32 %v151, %v152
    %v154 = vrot.slane %v153, 2
    %v155 = vadd.f32 %v153, %v154
    %v156 = vrot.slane %v155, 1
    %v157 = vadd.f32 %v155, %v156
    %v158 = vmul.f32 %v115, %v118
    %v159 = vrot.slane %v158, 4
    %v160 = vadd.f32 %v158, %v159
    %v161 = vrot.slane %v160, 2
    %v162 = vadd.f32 %v160, %v161
    %v163 = vrot.slane %v162, 1
    %v164 = vadd.f32 %v162, %v163
    %vm165 = vcmask 1040384
    %v166 = vsel %vm165, %v143, %v150
    %vm167 = vcmask 1041408
    %v168 = vsel %vm167, %v166, %v157
    %vm169 = vcmask 1042432
    %v170 = vsel %vm169, %v168, %v164
    %v171 = vmul.f32 %v108, %v120
    %v172 = vrot.slane %v171, 4
    %v173 = vadd.f32 %v171, %v172
    %v174 = vrot.slane %v173, 2
    %v175 = vadd.f32 %v173, %v174
    %v176 = vrot.slane %v175, 1
    %v177 = vadd.f32 %v175, %v176
    %v178 = vmul.f32 %v110, %v120
    %v179 = vrot.slane %v178, 4
    %v180 = vadd.f32 %v178, %v179
    %v181 = vrot.slane %v180, 2
    %v182 = vadd.f32 %v180, %v181
    %v183 = vrot.slane %v182, 1
    %v184 = vadd.f32 %v182, %v183
    %v185 = vmul.f32 %v113, %v120
    %v186 = vrot.slane %v185, 4
    %v187 = vadd.f32 %v185, %v186
    %v188 = vrot.slane %v187, 2
    %v189 = vadd.f32 %v187, %v188
    %v190 = vrot.slane %v189, 1
    %v191 = vadd.f32 %v189, %v190
    %v192 = vmul.f32 %v115, %v120
    %v193 = vrot.slane %v192, 4
    %v194 = vadd.f32 %v192, %v193
    %v195 = vrot.slane %v194, 2
    %v196 = vadd.f32 %v194, %v195
    %v197 = vrot.slane %v196, 1
    %v198 = vadd.f32 %v196, %v197
    %v199 = vsel %vm165, %v177, %v184
    %v200 = vsel %vm167, %v199, %v191
    %v201 = vsel %vm169, %v200, %v198
    %v202 = vmul.f32 %v108, %v123
    %v203 = vrot.slane %v202, 4
    %v204 = vadd.f32 %v202, %v203
    %v205 = vrot.slane %v204, 2
    %v206 = vadd.f32 %v204, %v205
    %v207 = vrot.slane %v206, 1
    %v208 = vadd.f32 %v206, %v207
    %v209 = vmul.f32 %v110, %v123
    %v210 = vrot.slane %v209, 4
    %v211 = vadd.f32 %v209, %v210
    %v212 = vrot.slane %v211, 2
    %v213 = vadd.f32 %v211, %v212
    %v214 = vrot.slane %v213, 1
    %v215 = vadd.f32 %v213, %v214
    %v216 = vmul.f32 %v113, %v123
    %v217 = vrot.slane %v216, 4
    %v218 = vadd.f32 %v216, %v217
    %v219 = vrot.slane %v218, 2
    %v220 = vadd.f32 %v218, %v219
    %v221 = vrot.slane %v220, 1
    %v222 = vadd.f32 %v220, %v221
    %v223 = vmul.f32 %v115, %v123
    %v224 = vrot.slane %v223, 4
    %v225 = vadd.f32 %v223, %v224
    %v226 = vrot.slane %v225, 2
    %v227 = vadd.f32 %v225, %v226
    %v228 = vrot.slane %v227, 1
    %v229 = vadd.f32 %v227, %v228
    %v230 = vsel %vm165, %v208, %v215
    %v231 = vsel %vm167, %v230, %v222
    %v232 = vsel %vm169, %v231, %v229
    %v233 = vmul.f32 %v108, %v125
    %v234 = vrot.slane %v233, 4
    %v235 = vadd.f32 %v233, %v234
    %v236 = vrot.slane %v235, 2
    %v237 = vadd.f32 %v235, %v236
    %v238 = vrot.slane %v237, 1
    %v239 = vadd.f32 %v237, %v238
    %v240 = vmul.f32 %v110, %v125
    %v241 = vrot.slane %v240, 4
    %v242 = vadd.f32 %v240, %v241
    %v243 = vrot.slane %v242, 2
    %v244 = vadd.f32 %v242, %v243
    %v245 = vrot.slane %v244, 1
    %v246 = vadd.f32 %v244, %v245
    %v247 = vmul.f32 %v113, %v125
    %v248 = vrot.slane %v247, 4
    %v249 = vadd.f32 %v247, %v248
    %v250 = vrot.slane %v249, 2
    %v251 = vadd.f32 %v249, %v250
    %v252 = vrot.slane %v251, 1
    %v253 = vadd.f32 %v251, %v252
    %v254 = vmul.f32 %v115, %v125
    %v255 = vrot.slane %v254, 4
    %v256 = vadd.f32 %v254, %v255
    %v257 = vrot.slane %v256, 2
    %v258 = vadd.f32 %v256, %v257
    %v259 = vrot.slane %v258, 1
    %v260 = vadd.f32 %v258, %v259
    %v261 = vsel %vm165, %v239, %v246
    %v262 = vsel %vm167, %v261, %v253
    %v263 = vsel %vm169, %v262, %v260
    %v264 = vmax.f32 %v170, %v201
    %v265 = vmin.f32 %v170, %v201
    %v266 = vmax.f32 %v232, %v263
    %v267 = vmin.f32 %v232, %v263
    %v268 = vmax.f32 %v265, %v266
    %v269 = vmin.f32 %v265, %v266
    %v270 = vmax.f32 %v264, %v268
    %v271 = vmin.f32 %v264, %v268
    %v272 = vmax.f32 %v269, %v267
    %v273 = vmin.f32 %v269, %v267
    %v274 = vmax.f32 %v271, %v272
    %v275 = vmin.f32 %v271, %v272
    %v276 = vsub.f32 %v270, %v270
    %v277 = vmul.f32 %v276, 0.5
    %v278 = vsub.f32 %v274, %v270
    %v279 = vmul.f32 %v278, 0.5
    %v280 = vsub.f32 %v275, %v270
    %v281 = vmul.f32 %v280, 0.5
    %v282 = vsub.f32 %v273, %v270
    %v283 = vmul.f32 %v282, 0.5
    %v284 = vadd.f32 %v277, 0.0
    %v285 = vmul.f32 %v277, %v277
    %v286 = vadd.f32 %v285, 0.0
    %v287 = vmul.f32 %v284, %v284
    %v288 = vsub.f32 %v286, %v287
    %v289 = vsub.f32 1.0, %v288
    %v290 = vmax.f32 %v289, 0.0
    %v291 = vrsqrt.pop %v290
    %v292 = vmul.f32 %v291, %v290
    %v293 = vmul.f32 %v292, %v291
    %v294 = vmul.f32 0.5, %v293
    %v295 = vsub.f32 1.5, %v294
    %v296 = vmul.f32 %v291, %v295
    %v297 = vmul.f32 %v290, %v296
    %vm298 = vcmp.eq.f32.partialorder %v290, inf
    %v299 = vsel %vm298, %v290, %v297
    %vm300 = vcmp.eq.f32.partialorder %v290, 0.0
    %v301 = vand.u32 %v290, 2147483648
    %v302 = vsel %vm300, %v301, %v299
    %v303 = vsub.f32 %v284, %v302
    %vm304 = vcmp.le.f32.partialorder %v303, %v277
    %v305 = vsel %vm304, 1, 0
    %v306 = vcvt.s32.f32 %v305
    %v307 = vadd.f32 %v306, 0.0
    %v308 = vadd.f32 %v284, %v279
    %v309 = vmul.f32 %v279, %v279
    %v310 = vadd.f32 %v286, %v309
    %v311 = vmul.f32 %v308, 0.5
    %v312 = vmul.f32 %v308, %v311
    %v313 = vsub.f32 %v310, %v312
    %v314 = vsub.f32 1.0, %v313
    %v315 = vmul.f32 %v314, 0.5
    %v316 = vmax.f32 %v315, 0.0
    %v317 = vrsqrt.pop %v316
    %v318 = vmul.f32 %v317, %v316
    %v319 = vmul.f32 %v318, %v317
    %v320 = vmul.f32 0.5, %v319
    %v321 = vsub.f32 1.5, %v320
    %v322 = vmul.f32 %v317, %v321
    %v323 = vmul.f32 %v316, %v322
    %vm324 = vcmp.eq.f32.partialorder %v316, inf
    %v325 = vsel %vm324, %v316, %v323
    %vm326 = vcmp.eq.f32.partialorder %v316, 0.0
    %v327 = vand.u32 %v316, 2147483648
    %v328 = vsel %vm326, %v327, %v325
    %v329 = vsub.f32 %v311, %v328
    %vm330 = vcmp.le.f32.partialorder %v329, %v279
    %v331 = vsel %vm330, 1, 0
    %v332 = vcvt.s32.f32 %v331
    %v333 = vadd.f32 %v307, %v332
    %v334 = vadd.f32 %v308, %v281
    %v335 = vmul.f32 %v281, %v281
    %v336 = vadd.f32 %v310, %v335
    %v337 = vmul.f32 %v334, 0.33333334
    %v338 = vmul.f32 %v334, %v337
    %v339 = vsub.f32 %v336, %v338
    %v340 = vsub.f32 1.0, %v339
    %v341 = vmul.f32 %v340, 0.33333334
    %v342 = vmax.f32 %v341, 0.0
    %v343 = vrsqrt.pop %v342
    %v344 = vmul.f32 %v343, %v342
    %v345 = vmul.f32 %v344, %v343
    %v346 = vmul.f32 0.5, %v345
    %v347 = vsub.f32 1.5, %v346
    %v348 = vmul.f32 %v343, %v347
    %v349 = vmul.f32 %v342, %v348
    %vm350 = vcmp.eq.f32.partialorder %v342, inf
    %v351 = vsel %vm350, %v342, %v349
    %vm352 = vcmp.eq.f32.partialorder %v342, 0.0
    %v353 = vand.u32 %v342, 2147483648
    %v354 = vsel %vm352, %v353, %v351
    %v355 = vsub.f32 %v337, %v354
    %vm356 = vcmp.le.f32.partialorder %v355, %v281
    %v357 = vsel %vm356, 1, 0
    %v358 = vcvt.s32.f32 %v357
    %v359 = vadd.f32 %v333, %v358
    %v360 = vadd.f32 %v334, %v283
    %v361 = vmul.f32 %v283, %v283
    %v362 = vadd.f32 %v336, %v361
    %v363 = vmul.f32 %v360, 0.25
    %v364 = vmul.f32 %v360, %v363
    %v365 = vsub.f32 %v362, %v364
    %v366 = vsub.f32 1.0, %v365
    %v367 = vmul.f32 %v366, 0.25
    %v368 = vmax.f32 %v367, 0.0
    %v369 = vrsqrt.pop %v368
    %v370 = vmul.f32 %v369, %v368
    %v371 = vmul.f32 %v370, %v369
    %v372 = vmul.f32 0.5, %v371
    %v373 = vsub.f32 1.5, %v372
    %v374 = vmul.f32 %v369, %v373
    %v375 = vmul.f32 %v368, %v374
    %vm376 = vcmp.eq.f32.partialorder %v368, inf
    %v377 = vsel %vm376, %v368, %v375
    %vm378 = vcmp.eq.f32.partialorder %v368, 0.0
    %v379 = vand.u32 %v368, 2147483648
    %v380 = vsel %vm378, %v379, %v377
    %v381 = vsub.f32 %v363, %v380
    %vm382 = vcmp.le.f32.partialorder %v381, %v283
    %v383 = vsel %vm382, 1, 0
    %v384 = vcvt.s32.f32 %v383
    %v385 = vadd.f32 %v359, %v384
    %vm386 = vcmp.eq.f32.partialorder %v385, 1.0
    %v387 = vsel %vm386, %v303, 0.0
    %v388 = vadd.f32 %v387, 0.0
    %vm389 = vcmp.eq.f32.partialorder %v385, 2.0
    %v390 = vsel %vm389, %v329, 0.0
    %v391 = vadd.f32 %v388, %v390
    %vm392 = vcmp.eq.f32.partialorder %v385, 3.0
    %v393 = vsel %vm392, %v355, 0.0
    %v394 = vadd.f32 %v391, %v393
    %vm395 = vcmp.eq.f32.partialorder %v385, 4.0
    %v396 = vsel %vm395, %v381, 0.0
    %v397 = vadd.f32 %v394, %v396
    %v398 = vsub.f32 %v170, %v270
    %v399 = vmul.f32 %v398, 0.5
    %v400 = vsub.f32 %v399, %v397
    %v401 = vmax.f32 %v400, 0.0
    %v402 = vmul.f32 %v401, %v401
    %v403 = vsub.f32 %v201, %v270
    %v404 = vmul.f32 %v403, 0.5
    %v405 = vsub.f32 %v404, %v397
    %v406 = vmax.f32 %v405, 0.0
    %v407 = vmul.f32 %v406, %v406
    %v408 = vsub.f32 %v232, %v270
    %v409 = vmul.f32 %v408, 0.5
    %v410 = vsub.f32 %v409, %v397
    %v411 = vmax.f32 %v410, 0.0
    %v412 = vmul.f32 %v411, %v411
    %v413 = vsub.f32 %v263, %v270
    %v414 = vmul.f32 %v413, 0.5
    %v415 = vsub.f32 %v414, %v397
    %v416 = vmax.f32 %v415, 0.0
    %v417 = vmul.f32 %v416, %v416
    %v418 = vperm.slane %v402, 0
    %v419 = vmul.f32 %v418, %v128
    %v420 = vperm.slane %v407, 0
    %v421 = vmul.f32 %v420, %v130
    %v422 = vadd.f32 %v419, %v421
    %v423 = vperm.slane %v412, 0
    %v424 = vmul.f32 %v423, %v133
    %v425 = vadd.f32 %v422, %v424
    %v426 = vperm.slane %v417, 0
    %v427 = vmul.f32 %v426, %v135
    %v428 = vadd.f32 %v425, %v427
    %v429 = vperm.slane %v402, 1
    %v430 = vmul.f32 %v429, %v128
    %v431 = vperm.slane %v407, 1
    %v432 = vmul.f32 %v431, %v130
    %v433 = vadd.f32 %v430, %v432
    %v434 = vperm.slane %v412, 1
    %v435 = vmul.f32 %v434, %v133
    %v436 = vadd.f32 %v433, %v435
    %v437 = vperm.slane %v417, 1
    %v438 = vmul.f32 %v437, %v135
    %v439 = vadd.f32 %v436, %v438
    %v440 = vperm.slane %v402, 2
    %v441 = vmul.f32 %v440, %v128
    %v442 = vperm.slane %v407, 2
    %v443 = vmul.f32 %v442, %v130
    %v444 = vadd.f32 %v441, %v443
    %v445 = vperm.slane %v412, 2
    %v446 = vmul.f32 %v445, %v133
    %v447 = vadd.f32 %v444, %v446
    %v448 = vperm.slane %v417, 2
    %v449 = vmul.f32 %v448, %v135
    %v450 = vadd.f32 %v447, %v449
    %v451 = vperm.slane %v402, 3
    %v452 = vmul.f32 %v451, %v128
    %v453 = vperm.slane %v407, 3
    %v454 = vmul.f32 %v453, %v130
    %v455 = vadd.f32 %v452, %v454
    %v456 = vperm.slane %v412, 3
    %v457 = vmul.f32 %v456, %v133
    %v458 = vadd.f32 %v455, %v457
    %v459 = vperm.slane %v417, 3
    %v460 = vmul.f32 %v459, %v135
    %v461 = vadd.f32 %v458, %v460
    %462 = vst [vmem:[#allocation2] sm:$0xff] %v428
    %463 = vst [vmem:[#allocation2 + $0x8] sm:$0xff] %v439
    %464 = vst [vmem:[#allocation2 + $0x10] sm:$0xff] %v450
    %465 = vst [vmem:[#allocation2 + $0x18] sm:$0xff] %v461
    // Predicated region
    $region10: #{tpu_custom_call.1} parent=1 // pred_check
      _
    $region11: #{tpu_custom_call.1} parent=1 // pred_check_branch
      %467 = sbr.rel (0) target = $region13
    $region12: #{tpu_custom_call.1} parent=1 // pred_region
      %469 = vsyncadd [#allocation3], 0
      %s470 = sshll.u32 [#allocation2], 4
      %s471 = int_to_ptr.vmem [resolvable:$true] %s470
      %s472 = sshll.u32 %s2, 4
      %s473 = int_to_ptr.hbm [resolvable:$true] %s472
      %478 = dma.vmem_to_hbm [thread:$0]  %s471, 512, %s473, [#allocation3], 128, 128, 8
    $region13: #{tpu_custom_call.1} parent=1 // pred_fallthru
      _
    // Predicated region
    $region14: #{tpu_custom_call.1} parent=1 // pred_check
      _
    $region15: #{tpu_custom_call.1} parent=1 // pred_check_branch
      %480 = sbr.rel (0) target = $region17
    $region16: #{tpu_custom_call.1} parent=1 // pred_region
      %482 = dma.done [#allocation3], 512
    $region17: #{tpu_custom_call.1} parent=1 // pred_fallthru
      _
    %483 = vsyncpa [#allocation3], 1

</llo_original>
